<compile_context>
chip_gen: v7x
topology: tpu7x:2x2x1
jax: 0.10.0
libtpu: 0.0.40
codegen_flags: <defaults>
</compile_context>

<pallas_src>
import functools

import jax
import jax.numpy as jnp
from jax.experimental import pallas as pl
from jax.experimental.pallas import tpu as pltpu


def _icarl_kernel(x_ref, lbl_ref, old_ref, out_ref, *,
                  c, c_old, ignore_index, bkg, hw, tp):
    """One grid step: a (C, TP) tile of logits for one batch element.

    x_ref   : (1, C, TP)      logits
    lbl_ref : (1, 1, TP)      int32 labels
    old_ref : (1, C_old, TP)  old-model (sigmoid) outputs
    out_ref : (1, 1, 1, 1)    f32 partial BCE sum for this tile
    """
    x = x_ref[0].astype(jnp.float32)          # (C, TP)
    lbl = lbl_ref[0]                          # (1, TP) int32
    old = old_ref[0].astype(jnp.float32)      # (C_old, TP)

    # one_hot(where(label != ignore, label, C), C+1)[:, :C]  ==
    # (channel == label) & (label != ignore)
    ch = jax.lax.broadcasted_iota(jnp.int32, (c, tp), 0)
    one_hot = jnp.logical_and(ch == lbl, lbl != ignore_index).astype(jnp.float32)

    # binary_cross_entropy_with_logits with the one-hot target everywhere:
    #   L(x, t) = max(x, 0) - x*t + log1p(exp(-|x|))
    loss = jnp.maximum(x, 0.0) - x * one_hot + jnp.log1p(jnp.exp(-jnp.abs(x)))
    row = jnp.sum(loss, axis=0, keepdims=True)                   # (1, TP)

    # Channels whose target is the old model's output (t[s:c_old] = old[s:]):
    #   L_correct - L_onehot = x * (one_hot - old)
    s = 1 if bkg else 0
    if c_old > s:
        corr = x[s:c_old, :] * (one_hot[s:c_old, :] - old[s:, :])
        row = row + jnp.sum(corr, axis=0, keepdims=True)

    # Only the final pixel tile can be partial (and only if TP doesn't divide
    # HW).  Mask via a select so garbage (NaN/Inf) in the padded tail cannot
    # propagate into the reduction.
    rem = hw % tp
    if rem != 0:
        last = pl.program_id(1) == pl.num_programs(1) - 1
        col = jax.lax.broadcasted_iota(jnp.int32, (1, tp), 1)
        valid = jnp.logical_or(jnp.logical_not(last), col < rem)
        row = jnp.where(valid, row, 0.0)

    out_ref[...] = jnp.sum(row).reshape(1, 1, 1, 1)


def _choose_tp(hw, bytes_per_col, target_block_bytes=4 * 1024 * 1024):
    """Pixel-tile width: big enough to amortize per-step overhead (~0.35us),
    small enough that (all inputs) x 2 pipeline buffers stays well under the
    32 MiB scoped-VMEM budget (safe on v7x's 64 MiB physical VMEM)."""
    tp = max(128, target_block_bytes // max(bytes_per_col, 1))
    if tp >= hw:
        return hw                              # single tile, no tail mask
    return max(128, (tp // 128) * 128)         # lane-aligned multiple of 128


def icarl_loss(inputs, targets, output_old, *, reduction="mean",
               ignore_index=255, bkg=False, tp=None):
    """JAX/Pallas equivalent of IcarlLoss.forward.

    inputs     : (N, C, H, W)     logits   (NCHW, like PyTorch)
    targets    : (N, H, W)        int labels
    output_old : (N, C_old, H, W) old-model outputs, C_old <= C
    """
    N, C, H, W = inputs.shape
    C_old = output_old.shape[1]
    HW = H * W

    # Free reshapes only (no transpose, no channel pad, no pixel pad).
    x = inputs.reshape(N, C, HW)
    lbl = targets.reshape(N, 1, HW).astype(jnp.int32)
    old = output_old.reshape(N, C_old, HW)

    if tp is None:
        bytes_per_col = (x.dtype.itemsize * C + old.dtype.itemsize * C_old
                         + lbl.dtype.itemsize)
        tp = _choose_tp(HW, bytes_per_col)
    nt = pl.cdiv(HW, tp)

    kernel = functools.partial(
        _icarl_kernel, c=C, c_old=C_old,
        ignore_index=ignore_index, bkg=bkg, hw=HW, tp=tp)

    partials = pl.pallas_call(
        kernel,
        out_shape=jax.ShapeDtypeStruct((N, nt, 1, 1), jnp.float32),
        grid_spec=pltpu.PrefetchScalarGridSpec(
            num_scalar_prefetch=0,
            grid=(N, nt),
            in_specs=[
                pl.BlockSpec((1, C, tp), lambda n, p: (n, 0, p)),
                pl.BlockSpec((1, 1, tp), lambda n, p: (n, 0, p)),
                pl.BlockSpec((1, C_old, tp), lambda n, p: (n, 0, p)),
            ],
            out_specs=pl.BlockSpec((1, 1, 1, 1), lambda n, p: (n, p, 0, 0)),
        ),
        compiler_params=pltpu.CompilerParams(
            dimension_semantics=("parallel", "parallel"),
            vmem_limit_bytes=32 * 1024 * 1024),
    )(x, lbl, old)

    total = jnp.sum(partials)                  # tiny (N*NT) epilogue sum in JAX
    if reduction == "mean":
        return total / jnp.float32(N * HW)     # sum over C, mean over (N,H,W)
    elif reduction == "sum":
        return total
    else:
        # TODO(synk): reduction='none' ((N,H,W) per-pixel map) not emitted by
        # this partial-sum kernel variant.
        raise NotImplementedError("reduction='none' not implemented")


def _reference(inputs, targets, output_old, *, ignore_index=255, bkg=False):
    """Pure-JAX reference mirroring the PyTorch module (reduction='mean')."""
    N, C, H, W = inputs.shape
    labels_new = jnp.where(targets != ignore_index, targets, C)
    t = jax.nn.one_hot(labels_new, C + 1, dtype=jnp.float32)      # (N,H,W,C+1)
    t = jnp.transpose(t, (0, 3, 1, 2))[:, :C]                     # (N,C,H,W)
    C_old = output_old.shape[1]
    if bkg:
        t = t.at[:, 1:C_old].set(output_old[:, 1:])
    else:
        t = t.at[:, :C_old].set(output_old)
    x = inputs
    loss = jnp.maximum(x, 0.0) - x * t + jnp.log1p(jnp.exp(-jnp.abs(x)))
    return loss.sum(axis=1).mean()


if __name__ == "__main__":
    key = jax.random.PRNGKey(0)
    k1, k2, k3 = jax.random.split(key, 3)

    N, C, C_old, H, W = 2, 6, 4, 16, 16
    inputs = jax.random.normal(k1, (N, C, H, W), dtype=jnp.float32)
    targets = jax.random.randint(k2, (N, H, W), 0, C).astype(jnp.int32)
    # a few ignore_index pixels to exercise the masking path
    targets = targets.at[:, :2, :].set(255)
    output_old = jax.nn.sigmoid(
        jax.random.normal(k3, (N, C_old, H, W), dtype=jnp.float32))

    def _check(got, want):
        assert abs(float(got) - float(want)) <= 1e-3 * max(1.0, abs(float(want))), (
            float(got), float(want))

    # default: single pixel tile per batch element, bkg=False, mean reduction
    loss = icarl_loss(inputs, targets, output_old)
    jax.block_until_ready(loss)
    _check(loss, _reference(inputs, targets, output_old))

    # bkg=True path (channel-0 keeps one-hot, channels 1..C_old-1 use old)
    loss_b = icarl_loss(inputs, targets, output_old, bkg=True)
    jax.block_until_ready(loss_b)
    _check(loss_b, _reference(inputs, targets, output_old, bkg=True))

    # multi-tile grid with a partial tail tile (HW=400, forced tp=128)
    H2 = W2 = 20
    inputs2 = jax.random.normal(k1, (N, C, H2, W2), dtype=jnp.float32)
    targets2 = jax.random.randint(k2, (N, H2, W2), 0, C).astype(jnp.int32)
    targets2 = targets2.at[:, :1, :].set(255)
    output_old2 = jax.nn.sigmoid(
        jax.random.normal(k3, (N, C_old, H2, W2), dtype=jnp.float32))
    loss2 = icarl_loss(inputs2, targets2, output_old2, tp=128)
    jax.block_until_ready(loss2)
    _check(loss2, _reference(inputs2, targets2, output_old2))

    # sum reduction path
    loss_s = icarl_loss(inputs, targets, output_old, reduction="sum")
    jax.block_until_ready(loss_s)
    _check(loss_s, _reference(inputs, targets, output_old) * (N * H * W))

    print("KERNEL_OK")
</pallas_src>

<mosaic_0001>
module attributes {stable_mosaic.version = 11 : i64} {
  func.func @_icarl_kernel(%arg0: i32, %arg1: i32, %arg2: memref<1x6x256xf32, #tpu.memory_space<vmem>>, %arg3: memref<1x1x256xi32, #tpu.memory_space<vmem>>, %arg4: memref<1x4x256xf32, #tpu.memory_space<vmem>>, %arg5: memref<1x1x1x1xf32, #tpu.memory_space<vmem>>) attributes {dimension_semantics = [#tpu.dimension_semantics<parallel>, #tpu.dimension_semantics<parallel>], iteration_bounds = array<i64: 2, 1>, scalar_prefetch = 0 : i64, scratch_operands = 0 : i64, tpu.core_type = #tpu.core_type<tc>, window_params = [{transform_indices = @transform_0, window_bounds = array<i64: 1, 6, 256>}, {transform_indices = @transform_1, window_bounds = array<i64: 1, 1, 256>}, {transform_indices = @transform_2, window_bounds = array<i64: 1, 4, 256>}, {transform_indices = @transform_3, window_bounds = array<i64: 1, 1, 1, 1>}]} {
    %c0 = arith.constant 0 : index
    %c0_0 = arith.constant 0 : index
    %c0_1 = arith.constant 0 : index
    %0 = vector.load %arg2[%c0, %c0_0, %c0_1] : memref<1x6x256xf32, #tpu.memory_space<vmem>>, vector<1x6x256xf32>
    %1 = vector.shape_cast %0 : vector<1x6x256xf32> to vector<6x256xf32>
    %c0_2 = arith.constant 0 : index
    %c0_3 = arith.constant 0 : index
    %c0_4 = arith.constant 0 : index
    %2 = vector.load %arg3[%c0_2, %c0_3, %c0_4] : memref<1x1x256xi32, #tpu.memory_space<vmem>>, vector<1x1x256xi32>
    %3 = vector.shape_cast %2 : vector<1x1x256xi32> to vector<1x256xi32>
    %c0_5 = arith.constant 0 : index
    %c0_6 = arith.constant 0 : index
    %c0_7 = arith.constant 0 : index
    %4 = vector.load %arg4[%c0_5, %c0_6, %c0_7] : memref<1x4x256xf32, #tpu.memory_space<vmem>>, vector<1x4x256xf32>
    %5 = vector.shape_cast %4 : vector<1x4x256xf32> to vector<4x256xf32>
    %6 = tpu.iota {dimensions = array<i32: 0>} : vector<6x256xi32>
    %7 = vector.broadcast %3 : vector<1x256xi32> to vector<6x256xi32>
    %8 = arith.cmpi eq, %6, %7 : vector<6x256xi32>
    %c255_i32 = arith.constant 255 : i32
    %9 = vector.broadcast %c255_i32 : i32 to vector<1x256xi32>
    %10 = arith.cmpi ne, %3, %9 : vector<1x256xi32>
    %11 = vector.broadcast %10 : vector<1x256xi1> to vector<6x256xi1>
    %12 = arith.andi %8, %11 : vector<6x256xi1>
    %13 = arith.extui %12 : vector<6x256xi1> to vector<6x256xi32>
    %14 = arith.sitofp %13 : vector<6x256xi32> to vector<6x256xf32>
    %cst = arith.constant 0.000000e+00 : f32
    %15 = vector.broadcast %cst : f32 to vector<6x256xf32>
    %16 = arith.maximumf %1, %15 : vector<6x256xf32>
    %17 = arith.mulf %1, %14 : vector<6x256xf32>
    %18 = arith.subf %16, %17 : vector<6x256xf32>
    %19 = math.absf %1 : vector<6x256xf32>
    %cst_8 = arith.constant 0.000000e+00 : f32
    %20 = vector.broadcast %cst_8 : f32 to vector<6x256xf32>
    %21 = arith.subf %20, %19 : vector<6x256xf32>
    %22 = math.exp %21 : vector<6x256xf32>
    %23 = math.log1p %22 : vector<6x256xf32>
    %24 = arith.addf %18, %23 : vector<6x256xf32>
    %cst_9 = arith.constant dense<0.000000e+00> : vector<256xf32>
    %25 = vector.multi_reduction <add>, %24, %cst_9 [0] : vector<6x256xf32> to vector<256xf32>
    %26 = vector.shape_cast %25 : vector<256xf32> to vector<1x256xf32>
    %27 = vector.extract_strided_slice %1 {offsets = [0, 0], sizes = [4, 256], strides = [1, 1]} : vector<6x256xf32> to vector<4x256xf32>
    %28 = vector.extract_strided_slice %14 {offsets = [0, 0], sizes = [4, 256], strides = [1, 1]} : vector<6x256xf32> to vector<4x256xf32>
    %29 = arith.subf %28, %5 : vector<4x256xf32>
    %30 = arith.mulf %27, %29 : vector<4x256xf32>
    %cst_10 = arith.constant dense<0.000000e+00> : vector<256xf32>
    %31 = vector.multi_reduction <add>, %30, %cst_10 [0] : vector<4x256xf32> to vector<256xf32>
    %32 = vector.shape_cast %31 : vector<256xf32> to vector<1x256xf32>
    %33 = arith.addf %26, %32 : vector<1x256xf32>
    %34 = vector.shape_cast %33 : vector<1x256xf32> to vector<1x1x256xf32>
    %cst_11 = arith.constant dense<0.000000e+00> : vector<1xf32>
    %35 = vector.multi_reduction <add>, %34, %cst_11 [1, 2] : vector<1x1x256xf32> to vector<1xf32>
    %36 = vector.shape_cast %35 : vector<1xf32> to vector<1x1x1xf32>
    %37 = vector.extract %36[0, 0, 0] : f32 from vector<1x1x1xf32>
    %38 = vector.broadcast %37 : f32 to vector<1x1x1x1xf32>
    %c0_12 = arith.constant 0 : index
    %c0_13 = arith.constant 0 : index
    %c0_14 = arith.constant 0 : index
    %c0_15 = arith.constant 0 : index
    %39 = vector.load %arg5[%c0_12, %c0_13, %c0_14, %c0_15] : memref<1x1x1x1xf32, #tpu.memory_space<vmem>>, vector<1x1x1x1xf32>
    tpu.vector_store %arg5[%c0_12, %c0_13, %c0_14, %c0_15], %38 {strides = array<i32>} : memref<1x1x1x1xf32, #tpu.memory_space<vmem>>, vector<1x1x1x1xf32>,
    return
  }
  func.func @transform_0(%arg0: i32, %arg1: i32) -> (i32, i32, i32) {
    %c0_i32 = arith.constant 0 : i32
    %c0_i32_0 = arith.constant 0 : i32
    return %arg0, %c0_i32, %arg1 : i32, i32, i32
  }
  func.func @transform_1(%arg0: i32, %arg1: i32) -> (i32, i32, i32) {
    %c0_i32 = arith.constant 0 : i32
    %c0_i32_0 = arith.constant 0 : i32
    return %arg0, %c0_i32, %arg1 : i32, i32, i32
  }
  func.func @transform_2(%arg0: i32, %arg1: i32) -> (i32, i32, i32) {
    %c0_i32 = arith.constant 0 : i32
    %c0_i32_0 = arith.constant 0 : i32
    return %arg0, %c0_i32, %arg1 : i32, i32, i32
  }
  func.func @transform_3(%arg0: i32, %arg1: i32) -> (i32, i32, i32, i32) {
    %c0_i32 = arith.constant 0 : i32
    %c0_i32_0 = arith.constant 0 : i32
    %c0_i32_1 = arith.constant 0 : i32
    return %arg0, %arg1, %c0_i32, %c0_i32_0 : i32, i32, i32, i32
  }
}

</mosaic_0001>

<llo_original>
// kernel: tpu_custom_call.1
$region0: #{tpu_custom_call.1}
  #allocation0 [shape = 'u32[]', space=smem, size = 0x4, offset = 0x4, fixed_abs, tag = 'smem constant byte address 0x4 - core index']
  #allocation1 [shape = 'u32[144,128]{1,0:T(1,128)}', space=vmem, size = 0x12000, scoped, tag = 'internal scratch']
  %s0 = inlined_call_operand.vmem [shape: f32[2,6,256], index: 0, kind: input, shape index: {}]
  %s1 = inlined_call_operand.vmem [shape: s32[2,1,256], index: 1, kind: input, shape index: {}]
  %s2 = inlined_call_operand.vmem [shape: f32[2,4,256], index: 2, kind: input, shape index: {}]
  %s3 = inlined_call_operand.vmem [shape: f32[2,1,1,1], index: 3, kind: output, shape index: {}]
  %s4 = sld [smem:[#allocation0]]
  $region45: #{tpu_custom_call.1} parent=0
    _
  %s6 = ssub.s32 1, %s4
  %s7 = scalar_select 0, %s6, %s4
  loop: start=0, step=1, limit=4
  $region2: #{tpu_custom_call.1} parent=0 // loop_pre_header
    _
  $region3: #{tpu_custom_call.1} parent=0 // loop_header
    %s9 = sphi 0, %s13
    %p10 = scmp.ge.s32.totalorder %s9, 4
    %s16 = sphi 0, %s28
    %s17 = sphi 0, %s24
    %s18 = sphi 0, %s16
    %s19 = sphi 0, %s17
    %s20 = sphi 0, %s18
    %s21 = sphi 0, %s19
    %s33 = sphi 0, %s35
    %s36 = sphi 0, %s33
    %s37 = sphi 0, %s36
    %s53 = sphi 0, %s37
    %s61 = sphi 0, %s63
    %s64 = sphi 0, %s61
    %s65 = sphi 0, %s64
    %s81 = sphi 0, %s65
    %s89 = sphi 0, %s91
    %s92 = sphi 0, %s89
    %s93 = sphi 0, %s92
    %s109 = sphi 0, %s93
    %s117 = sphi 0, %s119
    %s120 = sphi 0, %s117
    %s121 = sphi 0, %s120
    %s137 = sphi 0, %s121
  $region4: #{tpu_custom_call.1} parent=0 // loop_header_branch
    %12 = sbr.rel (%p10) target = $region8
  $region5: #{tpu_custom_call.1} parent=0 // loop_body
    %s14 = ssub.s32 %s9, 1
    %s15 = ssub.s32 %s9, 2
    %s22 = sadd.s32 1, %s17
    %p23 = scmp.ge.s32.totalorder %s22, 1
    %s24 = scalar_select %p23, 0, %s22
    %s25 = sadd.s32 1, %s16
    %s26 = scalar_select %p23, %s25, %s16
    %p27 = scmp.ge.s32.totalorder %s26, 2
    %s28 = scalar_select %p27, 0, %s26
    %s29 = ssub.s32 %s16, %s28
    %s30 = ssub.s32 %s17, %s24
    %s31 = sor.u32 %s29, %s30
    %p32 = scmp.eq.s32.totalorder %s31, 0
    %s34 = sadd.s32 %s33, 1
    %s35 = scalar_select %p32, %s33, %s34
    %p38 = pneg %p32
    %p39 = scmp.eq.s32.totalorder %s9, 1
    %p40 = por %p38, %p39
    %p41 = scmp.ne.s32.totalorder %s33, %s36
    %p42 = scmp.eq.s32.totalorder %s9, 0
    %p43 = por %p41, %p42
    %p44 = scmp.ne.s32.totalorder %s33, %s36
    %p45 = scmp.eq.s32.totalorder %s14, 1
    %p46 = por %p44, %p45
    %p47 = scmp.ne.s32.totalorder %s36, %s37
    %p48 = scmp.eq.s32.totalorder %s14, 0
    %p49 = por %p47, %p48
    %p50 = scmp.ne.s32.totalorder %s36, %s37
    %p51 = scmp.eq.s32.totalorder %s15, 1
    %p52 = por %p50, %p51
    %p54 = scmp.ne.s32.totalorder %s37, %s53
    %p55 = scmp.eq.s32.totalorder %s15, 0
    %p56 = por %p54, %p55
    %s57 = ssub.s32 %s16, %s28
    %s58 = ssub.s32 %s17, %s24
    %s59 = sor.u32 %s57, %s58
    %p60 = scmp.eq.s32.totalorder %s59, 0
    %s62 = sadd.s32 %s61, 1
    %s63 = scalar_select %p60, %s61, %s62
    %p66 = pneg %p60
    %p67 = scmp.eq.s32.totalorder %s9, 1
    %p68 = por %p66, %p67
    %p69 = scmp.ne.s32.totalorder %s61, %s64
    %p70 = scmp.eq.s32.totalorder %s9, 0
    %p71 = por %p69, %p70
    %p72 = scmp.ne.s32.totalorder %s61, %s64
    %p73 = scmp.eq.s32.totalorder %s14, 1
    %p74 = por %p72, %p73
    %p75 = scmp.ne.s32.totalorder %s64, %s65
    %p76 = scmp.eq.s32.totalorder %s14, 0
    %p77 = por %p75, %p76
    %p78 = scmp.ne.s32.totalorder %s64, %s65
    %p79 = scmp.eq.s32.totalorder %s15, 1
    %p80 = por %p78, %p79
    %p82 = scmp.ne.s32.totalorder %s65, %s81
    %p83 = scmp.eq.s32.totalorder %s15, 0
    %p84 = por %p82, %p83
    %s85 = ssub.s32 %s16, %s28
    %s86 = ssub.s32 %s17, %s24
    %s87 = sor.u32 %s85, %s86
    %p88 = scmp.eq.s32.totalorder %s87, 0
    %s90 = sadd.s32 %s89, 1
    %s91 = scalar_select %p88, %s89, %s90
    %p94 = pneg %p88
    %p95 = scmp.eq.s32.totalorder %s9, 1
    %p96 = por %p94, %p95
    %p97 = scmp.ne.s32.totalorder %s89, %s92
    %p98 = scmp.eq.s32.totalorder %s9, 0
    %p99 = por %p97, %p98
    %p100 = scmp.ne.s32.totalorder %s89, %s92
    %p101 = scmp.eq.s32.totalorder %s14, 1
    %p102 = por %p100, %p101
    %p103 = scmp.ne.s32.totalorder %s92, %s93
    %p104 = scmp.eq.s32.totalorder %s14, 0
    %p105 = por %p103, %p104
    %p106 = scmp.ne.s32.totalorder %s92, %s93
    %p107 = scmp.eq.s32.totalorder %s15, 1
    %p108 = por %p106, %p107
    %p110 = scmp.ne.s32.totalorder %s93, %s109
    %p111 = scmp.eq.s32.totalorder %s15, 0
    %p112 = por %p110, %p111
    %s113 = ssub.s32 %s16, %s28
    %s114 = ssub.s32 %s17, %s24
    %s115 = sor.u32 %s113, %s114
    %p116 = scmp.eq.s32.totalorder %s115, 0
    %s118 = sadd.s32 %s117, 1
    %s119 = scalar_select %p116, %s117, %s118
    %p122 = pneg %p116
    %p123 = scmp.eq.s32.totalorder %s9, 1
    %p124 = por %p122, %p123
    %p125 = scmp.ne.s32.totalorder %s117, %s120
    %p126 = scmp.eq.s32.totalorder %s9, 0
    %p127 = por %p125, %p126
    %p128 = scmp.ne.s32.totalorder %s117, %s120
    %p129 = scmp.eq.s32.totalorder %s14, 1
    %p130 = por %p128, %p129
    %p131 = scmp.ne.s32.totalorder %s120, %s121
    %p132 = scmp.eq.s32.totalorder %s14, 0
    %p133 = por %p131, %p132
    %p134 = scmp.ne.s32.totalorder %s120, %s121
    %p135 = scmp.eq.s32.totalorder %s15, 1
    %p136 = por %p134, %p135
    %p138 = scmp.ne.s32.totalorder %s121, %s137
    %p139 = scmp.eq.s32.totalorder %s15, 0
    %p140 = por %p138, %p139
    %p141 = scmp.le.s32.totalorder 1, %s9
    %p142 = scmp.lt.s32.totalorder %s9, 3
    %p143 = pnand %p141, %p142
    %p144 = pneg %p143
    // Predicated region
    $region9: #{tpu_custom_call.1} parent=5 // pred_check
      _
    $region10: #{tpu_custom_call.1} parent=5 // pred_check_branch
      %146 = sbr.rel (%p143) target = $region12
    $region11: #{tpu_custom_call.1} parent=5 // pred_region
      %s147 = ssub.s32 %s9, 1
    $region12: #{tpu_custom_call.1} parent=5 // pred_fallthru
      _
    %p148 = scmp.lt.s32.totalorder %s9, 2
    // Predicated region
    $region13: #{tpu_custom_call.1} parent=5 // pred_check
      %p149 = pneg %p148
    $region14: #{tpu_custom_call.1} parent=5 // pred_check_branch
      %151 = sbr.rel (%p149) target = $region16
    $region15: #{tpu_custom_call.1} parent=5 // pred_region
      // Predicated region
      $region17: #{tpu_custom_call.1} parent=15 // pred_check
        %p152 = pneg %p43
      $region18: #{tpu_custom_call.1} parent=15 // pred_check_branch
        %154 = sbr.rel (%p152) target = $region20
      $region19: #{tpu_custom_call.1} parent=15 // pred_region
        %s155 = smul.u32 2, %s17
        %p156 = scmp.lt.s32.totalorder %s16, 1
        %s157 = scalar_select %p156, %s16, 1
        %p158 = scmp.lt.s32.totalorder %s155, 1
        %s159 = scalar_select %p158, %s155, 1
        %s160 = smul.addr %s157, 2
        %s161 = sadd.s32 %s159, %s160
        %s162 = smul.addr %s161, 8
        %s163 = scalar_lea.vmem %s0, %s162
        %s164 = smul.u32 2, %s17
      $region20: #{tpu_custom_call.1} parent=15 // pred_fallthru
        _
      // Predicated region
      $region21: #{tpu_custom_call.1} parent=15 // pred_check
        %p165 = pneg %p71
      $region22: #{tpu_custom_call.1} parent=15 // pred_check_branch
        %167 = sbr.rel (%p165) target = $region24
      $region23: #{tpu_custom_call.1} parent=15 // pred_region
        %s168 = smul.u32 2, %s17
        %p169 = scmp.lt.s32.totalorder %s16, 1
        %s170 = scalar_select %p169, %s16, 1
        %p171 = scmp.lt.s32.totalorder %s168, 1
        %s172 = scalar_select %p171, %s168, 1
        %s173 = smul.addr %s170, 2
        %s174 = sadd.s32 %s172, %s173
        %s175 = scalar_lea.vmem %s1, %s174
        %s176 = smul.u32 2, %s17
      $region24: #{tpu_custom_call.1} parent=15 // pred_fallthru
        _
      // Predicated region
      $region25: #{tpu_custom_call.1} parent=15 // pred_check
        %p177 = pneg %p99
      $region26: #{tpu_custom_call.1} parent=15 // pred_check_branch
        %179 = sbr.rel (%p177) target = $region28
      $region27: #{tpu_custom_call.1} parent=15 // pred_region
        %s180 = smul.u32 2, %s17
        %p181 = scmp.lt.s32.totalorder %s16, 1
        %s182 = scalar_select %p181, %s16, 1
        %p183 = scmp.lt.s32.totalorder %s180, 1
        %s184 = scalar_select %p183, %s180, 1
        %s185 = smul.addr %s182, 2
        %s186 = sadd.s32 %s184, %s185
        %s187 = smul.addr %s186, 4
        %s188 = scalar_lea.vmem %s2, %s187
        %s189 = smul.u32 2, %s17
      $region28: #{tpu_custom_call.1} parent=15 // pred_fallthru
        _
    $region16: #{tpu_custom_call.1} parent=5 // pred_fallthru
      _
    %p190 = scmp.le.s32.totalorder 1, %s9
    %p191 = scmp.lt.s32.totalorder %s9, 3
    %p192 = pnand %p190, %p191
    %p193 = pneg %p192
    // Predicated region
    $region29: #{tpu_custom_call.1} parent=5 // pred_check
      _
    $region30: #{tpu_custom_call.1} parent=5 // pred_check_branch
      %195 = sbr.rel (%p192) target = $region32
    $region31: #{tpu_custom_call.1} parent=5 // pred_region
      %s196 = ssub.s32 %s9, 1
      %s197 = smul.u32 2, %s19
      %p198 = scmp.lt.s32.totalorder %s18, 1
      %s199 = scalar_select %p198, %s18, 1
      %p200 = scmp.lt.s32.totalorder %s197, 1
      %s201 = scalar_select %p200, %s197, 1
      %s202 = smul.addr %s199, 2
      %s203 = sadd.s32 %s201, %s202
      %s204 = smul.addr %s203, 8
      %s205 = scalar_lea.vmem %s0, %s204
      %p206 = pneg %p49
      %p207 = pneg %p46
      %s208 = smul.u32 2, %s19
      %p209 = scmp.lt.s32.totalorder %s18, 1
      %s210 = scalar_select %p209, %s18, 1
      %p211 = scmp.lt.s32.totalorder %s208, 1
      %s212 = scalar_select %p211, %s208, 1
      %s213 = smul.addr %s210, 2
      %s214 = sadd.s32 %s212, %s213
      %s215 = scalar_lea.vmem %s1, %s214
      %p216 = pneg %p77
      %p217 = pneg %p74
      %s218 = smul.u32 2, %s19
      %p219 = scmp.lt.s32.totalorder %s18, 1
      %s220 = scalar_select %p219, %s18, 1
      %p221 = scmp.lt.s32.totalorder %s218, 1
      %s222 = scalar_select %p221, %s218, 1
      %s223 = smul.addr %s220, 2
      %s224 = sadd.s32 %s222, %s223
      %s225 = smul.addr %s224, 4
      %s226 = scalar_lea.vmem %s2, %s225
      %p227 = pneg %p105
      %p228 = pneg %p102
      %p229 = pneg %p133
      %p230 = pneg %p130
      %p231 = scmp.lt.s32.totalorder %s18, 1
      %s232 = scalar_select %p231, %s18, 1
      %p233 = scmp.lt.s32.totalorder %s19, 0
      %s234 = scalar_select %p233, %s19, 0
      %s235 = sadd.s32 %s234, %s232
      %s236 = scalar_lea.vmem %s3, %s235
      %s237 = smul.u32 2, %s19
      %p238 = scmp.lt.s32.totalorder %s18, 1
      %s239 = scalar_select %p238, %s18, 1
      %p240 = scmp.lt.s32.totalorder %s237, 1
      %s241 = scalar_select %p240, %s237, 1
      %s242 = smul.addr %s239, 2
      %s243 = sadd.s32 %s241, %s242
      %s244 = smul.addr %s243, 8
      %s245 = scalar_lea.vmem %s0, %s244
      %s246 = smul.u32 2, %s19
      %s247 = smul.u32 2, %s19
      %p248 = scmp.lt.s32.totalorder %s18, 1
      %s249 = scalar_select %p248, %s18, 1
      %p250 = scmp.lt.s32.totalorder %s247, 1
      %s251 = scalar_select %p250, %s247, 1
      %s252 = smul.addr %s249, 2
      %s253 = sadd.s32 %s251, %s252
      %s254 = scalar_lea.vmem %s1, %s253
      %s255 = smul.u32 2, %s19
      %s256 = smul.u32 2, %s19
      %p257 = scmp.lt.s32.totalorder %s18, 1
      %s258 = scalar_select %p257, %s18, 1
      %p259 = scmp.lt.s32.totalorder %s256, 1
      %s260 = scalar_select %p259, %s256, 1
      %s261 = smul.addr %s258, 2
      %s262 = sadd.s32 %s260, %s261
      %s263 = smul.addr %s262, 4
      %s264 = scalar_lea.vmem %s2, %s263
      %s265 = smul.u32 2, %s19
      %p266 = scmp.lt.s32.totalorder %s18, 1
      %s267 = scalar_select %p266, %s18, 1
      %p268 = scmp.lt.s32.totalorder %s19, 0
      %s269 = scalar_select %p268, %s19, 0
      %s270 = sadd.s32 %s269, %s267
      %s271 = scalar_lea.vmem %s3, %s270
      %v272 = vld [vmem:[%s245] sm:$0x3f]
      %v273 = vld [vmem:[%s245 + $0x8] sm:$0x3f]
      %v274 = vld [vmem:[%s254] sm:$0x3]
      %v275 = vld [vmem:[%s264] sm:$0xff]
      %v276 = vlaneseq
      %v277 = vshrl.u32 %v276, 7
      %v278 = vlaneseq
      %v279 = vshrl.u32 %v278, 7
      %v280 = vsub.s32 0, %v279
      %v281 = vrot.slane %v274, %v280
      %v282 = vlaneseq
      %v283 = vshrl.u32 %v282, 7
      %v284 = vsub.s32 1, %v283
      %v285 = vrot.slane %v274, %v284
      %vm286 = vcmp.eq.s32.totalorder %v277, %v281
      %vm287 = vcmp.eq.s32.totalorder %v277, %v285
      %vm288 = vcmp.ne.s32.totalorder %v274, 255
      %v289 = vsel %vm288, 1, 0
      %v290 = vlaneseq
      %v291 = vshrl.u32 %v290, 7
      %v292 = vsub.s32 0, %v291
      %v293 = vrot.slane %v289, %v292
      %v294 = vlaneseq
      %v295 = vshrl.u32 %v294, 7
      %v296 = vsub.s32 1, %v295
      %v297 = vrot.slane %v289, %v296
      %vm298 = vcmp.eq.s32.totalorder %v293, 1
      %vm299 = vcmp.eq.s32.totalorder %v297, 1
      %vm300 = vmand %vm286, %vm298
      %vm301 = vmand %vm287, %vm299
      %v302 = vsel %vm300, 1, 0
      %v303 = vsel %vm301, 1, 0
      %v304 = vcvt.s32.f32 %v302
      %v305 = vcvt.s32.f32 %v303
      %v306 = vmax.f32 %v272, 0.0
      %v307 = vmax.f32 %v273, 0.0
      %v308 = vmul.f32 %v272, %v304
      %v309 = vmul.f32 %v273, %v305
      %v310 = vsub.f32 %v306, %v308
      %v311 = vsub.f32 %v307, %v309
      %v312 = vand.u32 2147483647, %v272
      %v313 = vand.u32 2147483647, %v273
      %v314 = vsub.f32 0.0, %v312
      %v315 = vsub.f32 0.0, %v313
      %v316 = vmul.f32 %v314, 1.442695
      %v317 = vpow.pop %v316
      %v318 = vmul.f32 %v315, 1.442695
      %v319 = vpow.pop %v318
      %v320 = vadd.f32 %v317, 1.0
      %v321 = vlog2.pop %v320
      %v322 = vmul.f32 %v321, 0.6931472
      %v323 = vmul.f32 -0.5, %v317
      %v324 = vadd.f32 %v323, 1.0
      %v325 = vmul.f32 %v324, %v317
      %v326 = vand.u32 2147483647, %v317
      %vm327 = vcmp.lt.f32.partialorder %v326, 0.0004427343
      %v328 = vsel %vm327, %v325, %v322
      %v329 = vadd.f32 %v319, 1.0
      %v330 = vlog2.pop %v329
      %v331 = vmul.f32 %v330, 0.6931472
      %v332 = vmul.f32 -0.5, %v319
      %v333 = vadd.f32 %v332, 1.0
      %v334 = vmul.f32 %v333, %v319
      %v335 = vand.u32 2147483647, %v319
      %vm336 = vcmp.lt.f32.partialorder %v335, 0.0004427343
      %v337 = vsel %vm336, %v334, %v331
      %v338 = vadd.f32 %v310, %v328
      %v339 = vadd.f32 %v311, %v337
      %vm340 = vcmask 1045504
      %v341 = vsel %vm340, %v338, 0.0
      %v342 = vrot.slane %v341, 4
      %v343 = vadd.f32 %v341, %v342
      %v344 = vrot.slane %v343, 2
      %v345 = vadd.f32 %v343, %v344
      %v346 = vrot.slane %v345, 1
      %v347 = vadd.f32 %v345, %v346
      %v348 = vsel %vm340, %v339, 0.0
      %v349 = vrot.slane %v348, 4
      %v350 = vadd.f32 %v348, %v349
      %v351 = vrot.slane %v350, 2
      %v352 = vadd.f32 %v350, %v351
      %v353 = vrot.slane %v352, 1
      %v354 = vadd.f32 %v352, %v353
      %v356 = vcombine.high %v275, %v275
      %v358 = vsub.f32 %v304, %v275
      %v359 = vsub.f32 %v305, %v356
      %v360 = vmul.f32 %v272, %v358
      %v361 = vmul.f32 %v273, %v359
      %vm362 = vcmask 1043456
      %v363 = vsel %vm362, %v360, 0.0
      %v364 = vrot.slane %v363, 4
      %v365 = vadd.f32 %v363, %v364
      %v366 = vrot.slane %v365, 2
      %v367 = vadd.f32 %v365, %v366
      %v368 = vrot.slane %v367, 1
      %v369 = vadd.f32 %v367, %v368
      %v370 = vsel %vm362, %v361, 0.0
      %v371 = vrot.slane %v370, 4
      %v372 = vadd.f32 %v370, %v371
      %v373 = vrot.slane %v372, 2
      %v374 = vadd.f32 %v372, %v373
      %v375 = vrot.slane %v374, 1
      %v376 = vadd.f32 %v374, %v375
      %v377 = vadd.f32 %v347, %v369
      %v378 = vadd.f32 %v354, %v376
      %vm379 = vcmask 1040384
      %v380 = vsel %vm379, %v377, 0.0
      %v381 = vsel %vm379, %v378, 0.0
      %v382 = vadd.f32 %v380, %v381
      %383 = vadd.xlane.f32.xlu0 %v382
      %v384 = vpop.xlane.xlu0 %383
      %v385 = vrot.slane %v384, 4
      %v386 = vadd.f32 %v384, %v385
      %v387 = vrot.slane %v386, 2
      %v388 = vadd.f32 %v386, %v387
      %v389 = vrot.slane %v388, 1
      %v390 = vadd.f32 %v388, %v389
      %s391 = vtos %v390
      %v392 = vstv %s391
      %vm393 = vcmask 0
      %394 = vst.msk [vmem:[%s271] sm:$0x1] %vm393, %v392
      %p395 = scmp.lt.s32.totalorder %s18, 1
      %s396 = scalar_select %p395, %s18, 1
      %p397 = scmp.lt.s32.totalorder %s19, 0
      %s398 = scalar_select %p397, %s19, 0
      %s399 = sadd.s32 %s398, %s396
      %s400 = scalar_lea.vmem %s3, %s399
      // Predicated region
      $region33: #{tpu_custom_call.1} parent=31 // pred_check
        %p401 = pneg %p130
      $region34: #{tpu_custom_call.1} parent=31 // pred_check_branch
        %403 = sbr.rel (%p401) target = $region36
      $region35: #{tpu_custom_call.1} parent=31 // pred_region
        _
      $region36: #{tpu_custom_call.1} parent=31 // pred_fallthru
        _
    $region32: #{tpu_custom_call.1} parent=5 // pred_fallthru
      _
    %p404 = scmp.le.s32.totalorder 2, %s9
    // Predicated region
    $region37: #{tpu_custom_call.1} parent=5 // pred_check
      %p405 = pneg %p404
    $region38: #{tpu_custom_call.1} parent=5 // pred_check_branch
      %407 = sbr.rel (%p405) target = $region40
    $region39: #{tpu_custom_call.1} parent=5 // pred_region
      %s408 = ssub.s32 %s9, 2
      // Predicated region
      $region41: #{tpu_custom_call.1} parent=39 // pred_check
        %p409 = pneg %p136
      $region42: #{tpu_custom_call.1} parent=39 // pred_check_branch
        %411 = sbr.rel (%p409) target = $region44
      $region43: #{tpu_custom_call.1} parent=39 // pred_region
        %p412 = scmp.lt.s32.totalorder %s20, 1
        %s413 = scalar_select %p412, %s20, 1
        %p414 = scmp.lt.s32.totalorder %s21, 0
        %s415 = scalar_select %p414, %s21, 0
        %s416 = sadd.s32 %s415, %s413
        %s417 = scalar_lea.vmem %s3, %s416
      $region44: #{tpu_custom_call.1} parent=39 // pred_fallthru
        _
    $region40: #{tpu_custom_call.1} parent=5 // pred_fallthru
      _
  $region6: #{tpu_custom_call.1} parent=0 // loop_footer
    %s13 = sadd.s32 1, %s9
  $region7: #{tpu_custom_call.1} parent=0 // loop_footer_branch
    %8 = sbr.rel target = $region3
  $region8: #{tpu_custom_call.1} parent=0 // loop_exit
    _

</llo_original>
